<compile_context>
chip_gen: v7x
topology: tpu7x:2x2x1
jax: 0.10.0
libtpu: 0.0.40
codegen_flags: <defaults>
</compile_context>

<pallas_src>
import math
from functools import partial

import jax
import jax.numpy as jnp
from jax.experimental import pallas as pl
from jax.experimental.pallas import tpu as pltpu


def _round_up(x, m):
    return ((x + m - 1) // m) * m


def _projector_kernel(x_ref, w1_ref, b1_ref, w2_ref, b2_ref, o_ref, *, compute_dtype):
    """Fused ReLU(x @ w1 + b1) @ w2 + b2 for one (tm, D) row tile."""
    # Cast x in-kernel (VPU) so the DMA moves native-dtype bytes exactly once.
    x = x_ref[...].astype(compute_dtype)
    # fc1 on the MXU, f32 accumulation.
    h = jnp.dot(x, w1_ref[...], preferred_element_type=jnp.float32)
    h = jnp.maximum(h + b1_ref[...], 0.0)  # bias + ReLU epilogue (VPU, hidden under MXU)
    # fc2 on the MXU; hidden activation stays in VMEM.
    # TODO(synk): keep h in f32 for the second matmul if exact f32 parity with the
    # PyTorch module is required (bf16 hidden is the documented contract here).
    y = jnp.dot(h.astype(compute_dtype), w2_ref[...], preferred_element_type=jnp.float32)
    o_ref[...] = (y + b2_ref[...]).astype(o_ref.dtype)


def prepare_projector_params(params, compute_dtype=jnp.bfloat16):
    """Cast/reshape weights ONCE, outside the per-forward path."""
    return dict(
        w1=jnp.asarray(params["w1"], compute_dtype),
        b1=jnp.asarray(params["b1"], jnp.float32).reshape(1, -1),
        w2=jnp.asarray(params["w2"], compute_dtype),
        b2=jnp.asarray(params["b2"], jnp.float32).reshape(1, -1),
    )


def _pick_row_tile(M, D, H, N, block_m, vmem_budget_bytes, x_itemsize, out_itemsize):
    """Largest 16-aligned row tile whose estimated VMEM footprint fits the budget."""

    def footprint(tm):
        x_tile = 2 * tm * D * x_itemsize          # double-buffered x tile (native dtype)
        weights = (D * H + H * N) * 2             # bf16 weights, single-buffered
        biases = (H + N) * 4
        hidden = tm * H * (4 + 2)                 # f32 hidden + bf16 cast for fc2
        out_tile = 2 * tm * N * out_itemsize      # double-buffered out tile
        return x_tile + weights + biases + hidden + out_tile

    tm = min(block_m, _round_up(M, 16))
    tm = max(16, _round_up(tm, 16))
    while tm > 16 and footprint(tm) > vmem_budget_bytes:
        tm = max(16, _round_up(tm // 2, 16))
    return tm, footprint(tm)


def projector_forward(x, w1, b1, w2, b2, *, block_m=512, compute_dtype=jnp.bfloat16,
                      out_dtype=jnp.float32, vmem_budget_bytes=24 << 20):
    """x:(M,D)  w1:(D,H) b1:(1,H)  w2:(H,N) b2:(1,N)  -> (M,N) out_dtype."""
    M, D = x.shape
    H = w1.shape[1]
    N = w2.shape[1]
    out_itemsize = jnp.dtype(out_dtype).itemsize

    tm, fp = _pick_row_tile(M, D, H, N, block_m, vmem_budget_bytes,
                            x.dtype.itemsize, out_itemsize)
    # Explicit scoped-VMEM limit: enough headroom over the estimate, but <=48 MiB
    # so a v6e-comfortable config never thrashes v7x's 64 MiB physical VMEM.
    vmem_limit = int(min(max(2 * fp, 16 << 20), 48 << 20))

    cost = pl.CostEstimate(
        flops=2 * M * D * H + 2 * M * H * N,
        transcendentals=0,
        bytes_accessed=(M * D * x.dtype.itemsize + (D * H + H * N) * 2
                        + (H + N) * 4 + M * N * out_itemsize),
    )

    out = pl.pallas_call(
        partial(_projector_kernel, compute_dtype=compute_dtype),
        out_shape=jax.ShapeDtypeStruct((M, N), out_dtype),
        grid=(pl.cdiv(M, tm),),  # partial last block is clipped by Pallas
        in_specs=[
            pl.BlockSpec((tm, D), lambda i: (i, 0)),                                   # x tile, streamed over M
            pl.BlockSpec((D, H), lambda i: (0, 0), pipeline_mode=pl.Buffered(1)),      # w1, VMEM-resident
            pl.BlockSpec((1, H), lambda i: (0, 0), pipeline_mode=pl.Buffered(1)),      # b1
            pl.BlockSpec((H, N), lambda i: (0, 0), pipeline_mode=pl.Buffered(1)),      # w2, VMEM-resident
            pl.BlockSpec((1, N), lambda i: (0, 0), pipeline_mode=pl.Buffered(1)),      # b2
        ],
        out_specs=pl.BlockSpec((tm, N), lambda i: (i, 0)),
        compiler_params=pltpu.CompilerParams(
            dimension_semantics=("parallel",),  # shard M tiles across TCs (v7x)
            vmem_limit_bytes=vmem_limit,
        ),
        cost_estimate=cost,
    )(x, w1, b1, w2, b2)

    return out


def projector_apply(params, x, *, compute_dtype=jnp.bfloat16, **kw):
    """Accepts any leading dims, like the nn.Module: (..., D) -> (..., cl_feat_dim).

    `params` may be raw (b1 of shape (H,)) or already run through
    prepare_projector_params; raw params are prepared on the fly.
    """
    if params["b1"].ndim == 1:
        params = prepare_projector_params(params, compute_dtype)
    lead = x.shape[:-1]
    y = projector_forward(
        x.reshape(-1, x.shape[-1]),
        params["w1"], params["b1"], params["w2"], params["b2"],
        compute_dtype=compute_dtype, **kw,
    )
    return y.reshape(*lead, y.shape[-1])


if __name__ == "__main__":
    embed_dim, cl_feat_dim, batch = 32, 16, 2

    key = jax.random.PRNGKey(0)
    k1, k2, k3, k4, kx = jax.random.split(key, 5)

    # PyTorch nn.Linear default init: U(-1/sqrt(fan_in), 1/sqrt(fan_in))
    bound = 1.0 / math.sqrt(embed_dim)
    raw_params = dict(
        w1=jax.random.uniform(k1, (embed_dim, embed_dim), jnp.float32, -bound, bound),
        b1=jax.random.uniform(k2, (embed_dim,), jnp.float32, -bound, bound),
        w2=jax.random.uniform(k3, (embed_dim, cl_feat_dim), jnp.float32, -bound, bound),
        b2=jax.random.uniform(k4, (cl_feat_dim,), jnp.float32, -bound, bound),
    )
    # Cast weights to the MXU compute dtype ONCE, outside the per-call path.
    params = prepare_projector_params(raw_params)

    x = jax.random.normal(kx, (batch, embed_dim), jnp.float32)
    out = jax.block_until_ready(projector_apply(params, x))
    assert out.shape == (batch, cl_feat_dim), out.shape
    assert bool(jnp.all(jnp.isfinite(out)))

    # pure-JAX f32 reference (loose tolerance: kernel matmuls run in bf16 with f32 accum)
    ref = jnp.maximum(x @ raw_params["w1"] + raw_params["b1"], 0.0) @ raw_params["w2"] + raw_params["b2"]
    assert float(jnp.max(jnp.abs(out - ref))) < 2e-2

    # Exercise the multi-tile + partial-last-block path (M=21 rows, 16-row tiles, grid=(2,)).
    x2 = jax.random.normal(jax.random.PRNGKey(1), (3, 7, embed_dim), jnp.float32)
    out2 = jax.block_until_ready(projector_apply(params, x2, block_m=16))
    ref2 = jnp.maximum(x2 @ raw_params["w1"] + raw_params["b1"], 0.0) @ raw_params["w2"] + raw_params["b2"]
    assert out2.shape == (3, 7, cl_feat_dim), out2.shape
    assert float(jnp.max(jnp.abs(out2 - ref2))) < 2e-2

    print("KERNEL_OK")
</pallas_src>

<mosaic_0001>
module attributes {stable_mosaic.version = 11 : i64} {
  func.func @_projector_kernel(%arg0: i32, %arg1: memref<16x32xf32, #tpu.memory_space<vmem>>, %arg2: memref<32x32xbf16, #tpu.memory_space<vmem>>, %arg3: memref<1x32xf32, #tpu.memory_space<vmem>>, %arg4: memref<32x16xbf16, #tpu.memory_space<vmem>>, %arg5: memref<1x16xf32, #tpu.memory_space<vmem>>, %arg6: memref<16x16xf32, #tpu.memory_space<vmem>>) attributes {dimension_semantics = [#tpu.dimension_semantics<parallel>], iteration_bounds = array<i64: 1>, scalar_prefetch = 0 : i64, scratch_operands = 0 : i64, tpu.core_type = #tpu.core_type<tc>, window_params = [{transform_indices = @transform_0, window_bounds = array<i64: 16, 32>}, {pipeline_mode = #tpu.pipeline_mode<synchronous>, transform_indices = @transform_1, window_bounds = array<i64: 32, 32>}, {pipeline_mode = #tpu.pipeline_mode<synchronous>, transform_indices = @transform_2, window_bounds = array<i64: 1, 32>}, {pipeline_mode = #tpu.pipeline_mode<synchronous>, transform_indices = @transform_3, window_bounds = array<i64: 32, 16>}, {pipeline_mode = #tpu.pipeline_mode<synchronous>, transform_indices = @transform_4, window_bounds = array<i64: 1, 16>}, {transform_indices = @transform_5, window_bounds = array<i64: 16, 16>}]} {
    %c0 = arith.constant 0 : index
    %c0_0 = arith.constant 0 : index
    %0 = vector.load %arg1[%c0, %c0_0] : memref<16x32xf32, #tpu.memory_space<vmem>>, vector<16x32xf32>
    %1 = arith.truncf %0 : vector<16x32xf32> to vector<16x32xbf16>
    %c0_1 = arith.constant 0 : index
    %c0_2 = arith.constant 0 : index
    %2 = vector.load %arg2[%c0_1, %c0_2] : memref<32x32xbf16, #tpu.memory_space<vmem>>, vector<32x32xbf16>
    %cst = arith.constant dense<0.000000e+00> : vector<16x32xf32>
    %3 = tpu.matmul %1, %2, %cst {dimension_numbers = #tpu.dot_dimension_numbers<[1], [0], [0], [1], [0, 0, 1, 1], [], []>} : vector<16x32xbf16>, vector<32x32xbf16>, vector<16x32xf32> -> vector<16x32xf32>
    %c0_3 = arith.constant 0 : index
    %c0_4 = arith.constant 0 : index
    %4 = vector.load %arg3[%c0_3, %c0_4] : memref<1x32xf32, #tpu.memory_space<vmem>>, vector<1x32xf32>
    %5 = vector.broadcast %4 : vector<1x32xf32> to vector<16x32xf32>
    %6 = arith.addf %3, %5 : vector<16x32xf32>
    %cst_5 = arith.constant 0.000000e+00 : f32
    %7 = vector.broadcast %cst_5 : f32 to vector<16x32xf32>
    %8 = arith.maximumf %6, %7 : vector<16x32xf32>
    %9 = arith.truncf %8 : vector<16x32xf32> to vector<16x32xbf16>
    %c0_6 = arith.constant 0 : index
    %c0_7 = arith.constant 0 : index
    %10 = vector.load %arg4[%c0_6, %c0_7] : memref<32x16xbf16, #tpu.memory_space<vmem>>, vector<32x16xbf16>
    %cst_8 = arith.constant dense<0.000000e+00> : vector<16x16xf32>
    %11 = tpu.matmul %9, %10, %cst_8 {dimension_numbers = #tpu.dot_dimension_numbers<[1], [0], [0], [1], [0, 0, 1, 1], [], []>} : vector<16x32xbf16>, vector<32x16xbf16>, vector<16x16xf32> -> vector<16x16xf32>
    %c0_9 = arith.constant 0 : index
    %c0_10 = arith.constant 0 : index
    %12 = vector.load %arg5[%c0_9, %c0_10] : memref<1x16xf32, #tpu.memory_space<vmem>>, vector<1x16xf32>
    %13 = vector.broadcast %12 : vector<1x16xf32> to vector<16x16xf32>
    %14 = arith.addf %11, %13 : vector<16x16xf32>
    %c0_11 = arith.constant 0 : index
    %c0_12 = arith.constant 0 : index
    %15 = vector.load %arg6[%c0_11, %c0_12] : memref<16x16xf32, #tpu.memory_space<vmem>>, vector<16x16xf32>
    tpu.vector_store %arg6[%c0_11, %c0_12], %14 {strides = array<i32>} : memref<16x16xf32, #tpu.memory_space<vmem>>, vector<16x16xf32>,
    return
  }
  func.func @transform_0(%arg0: i32) -> (i32, i32) {
    %c0_i32 = arith.constant 0 : i32
    %c0_i32_0 = arith.constant 0 : i32
    return %arg0, %c0_i32 : i32, i32
  }
  func.func @transform_1(%arg0: i32) -> (i32, i32) {
    %c0_i32 = arith.constant 0 : i32
    %c0_i32_0 = arith.constant 0 : i32
    %c0_i32_1 = arith.constant 0 : i32
    return %c0_i32, %c0_i32_0 : i32, i32
  }
  func.func @transform_2(%arg0: i32) -> (i32, i32) {
    %c0_i32 = arith.constant 0 : i32
    %c0_i32_0 = arith.constant 0 : i32
    %c0_i32_1 = arith.constant 0 : i32
    return %c0_i32, %c0_i32_0 : i32, i32
  }
  func.func @transform_3(%arg0: i32) -> (i32, i32) {
    %c0_i32 = arith.constant 0 : i32
    %c0_i32_0 = arith.constant 0 : i32
    %c0_i32_1 = arith.constant 0 : i32
    return %c0_i32, %c0_i32_0 : i32, i32
  }
  func.func @transform_4(%arg0: i32) -> (i32, i32) {
    %c0_i32 = arith.constant 0 : i32
    %c0_i32_0 = arith.constant 0 : i32
    %c0_i32_1 = arith.constant 0 : i32
    return %c0_i32, %c0_i32_0 : i32, i32
  }
  func.func @transform_5(%arg0: i32) -> (i32, i32) {
    %c0_i32 = arith.constant 0 : i32
    %c0_i32_0 = arith.constant 0 : i32
    return %arg0, %c0_i32 : i32, i32
  }
}

</mosaic_0001>

<llo_original>
// kernel: tpu_custom_call.1
$region0: #{tpu_custom_call.1}
  #allocation0 [shape = 'u32[]', space=smem, size = 0x4, offset = 0x4, fixed_abs, tag = 'smem constant byte address 0x4 - core index']
  #allocation1 [shape = 'u32[144,128]{1,0:T(1,128)}', space=vmem, size = 0x12000, scoped, tag = 'internal scratch']
  %s0 = inlined_call_operand.vmem [shape: f32[2,32], index: 0, kind: input, shape index: {}]
  %s1 = inlined_call_operand.vmem [shape: bf16[32,32], index: 1, kind: input, shape index: {}]
  %s2 = inlined_call_operand.vmem [shape: f32[1,32], index: 2, kind: input, shape index: {}]
  %s3 = inlined_call_operand.vmem [shape: bf16[32,16], index: 3, kind: input, shape index: {}]
  %s4 = inlined_call_operand.vmem [shape: f32[1,16], index: 4, kind: input, shape index: {}]
  %s5 = inlined_call_operand.hbm [shape: f32[2,16], index: 5, kind: output, shape index: {}]
  %s6 = sld [smem:[#allocation0]]
  $region30: #{tpu_custom_call.1} parent=0
    _
  %s8 = ssub.s32 1, %s6
  %s9 = scalar_select 0, %s8, %s6
  $region1: #{tpu_custom_call.1} parent=0
    #allocation2 [shape = 'u8[8192]{0}', space=vmem, size = 0x2000, scoped, tag = 'output window, operand 0, single buffered']
    #allocation3 [shape = 's32[1]{0}', space=sflag, size = 0x4, scoped, tag = 'scoped memory for tpu_custom_call.1']
    %10 = vsyncpa [#allocation3], 0
    // Predicated region
    $region2: #{tpu_custom_call.1} parent=1 // pred_check
      _
    $region3: #{tpu_custom_call.1} parent=1 // pred_check_branch
      %12 = sbr.rel (0) target = $region5
    $region4: #{tpu_custom_call.1} parent=1 // pred_region
      _
    $region5: #{tpu_custom_call.1} parent=1 // pred_fallthru
      _
    // Predicated region
    $region6: #{tpu_custom_call.1} parent=1 // pred_check
      _
    $region7: #{tpu_custom_call.1} parent=1 // pred_check_branch
      %14 = sbr.rel (0) target = $region9
    $region8: #{tpu_custom_call.1} parent=1 // pred_region
      _
    $region9: #{tpu_custom_call.1} parent=1 // pred_fallthru
      _
    // Predicated region
    $region10: #{tpu_custom_call.1} parent=1 // pred_check
      _
    $region11: #{tpu_custom_call.1} parent=1 // pred_check_branch
      %16 = sbr.rel (0) target = $region13
    $region12: #{tpu_custom_call.1} parent=1 // pred_region
      _
    $region13: #{tpu_custom_call.1} parent=1 // pred_fallthru
      _
    // Predicated region
    $region14: #{tpu_custom_call.1} parent=1 // pred_check
      _
    $region15: #{tpu_custom_call.1} parent=1 // pred_check_branch
      %18 = sbr.rel (0) target = $region17
    $region16: #{tpu_custom_call.1} parent=1 // pred_region
      _
    $region17: #{tpu_custom_call.1} parent=1 // pred_fallthru
      _
    // Predicated region
    $region18: #{tpu_custom_call.1} parent=1 // pred_check
      _
    $region19: #{tpu_custom_call.1} parent=1 // pred_check_branch
      %20 = sbr.rel (0) target = $region21
    $region20: #{tpu_custom_call.1} parent=1 // pred_region
      _
    $region21: #{tpu_custom_call.1} parent=1 // pred_fallthru
      _
    %v22 = vld [vmem:[%s0] sm:$0xff]
    %v23 = vld [vmem:[%s0 + $0x8] sm:$0xff]
    %v24 = vpack.c.bf16 %v23, %v22
    %v25 = vld [vmem:[%s1] sm:$0xf]
    %v26 = vld [vmem:[%s1 + $0x4] sm:$0xf]
    %v27 = vld [vmem:[%s1 + $0x8] sm:$0xf]
    %v28 = vld [vmem:[%s1 + $0xc] sm:$0xf]
    %v29 = vld [vmem:[%s2] sm:$0x1]
    %v31 = vlaneseq
    %v32 = vshrl.u32 %v31, 7
    %v33 = vsub.s32 0, %v32
    %v34 = vrot.slane %v29, %v33
    %v40 = vunpack.c.l.b16 %v25
    %v41 = vunpack.c.l.b16 %v26
    %v42 = vunpack.c.l.b16 %v27
    %v43 = vunpack.c.l.b16 %v28
    %v44 = vpack.c.b16 %v41, %v40
    %v45 = vpack.c.b16 %v43, %v42
    %vm48 = vcmask 261120
    %v50 = vsel %vm48, %v24, 0
    %52 = vmatprep.subr.bf16.mxu0 0
    %53 = vmatpush1.bf16.msra.mxu0 %v44
    %54 = vmatprep.subr.bf16.mxu0 0
    %55 = vmatpush1.bf16.msra.mxu0 %v45
    %56 = vmatprep.subr.bf16.mxu0 0
    %57 = vmatpush1.bf16.msra.mxu0 0
    %58 = vmatprep.subr.bf16.mxu0 0
    %59 = vmatpush1.bf16.msra.mxu0 0
    %60 = vmatprep.subr.bf16.mxu0 0
    %61 = vmatpush1.bf16.msra.mxu0 0
    %62 = vmatprep.subr.bf16.mxu0 0
    %63 = vmatpush1.bf16.msra.mxu0 0
    %64 = vmatprep.subr.bf16.mxu0 0
    %65 = vmatpush1.bf16.msra.mxu0 0
    %66 = vmatprep.subr.bf16.mxu0 0
    %67 = vmatpush1.bf16.msra.mxu0 0
    %68 = vmatprep.subr.bf16.mxu0 0
    %69 = vmatpush1.bf16.msra.mxu0 0
    %70 = vmatprep.subr.bf16.mxu0 0
    %71 = vmatpush1.bf16.msra.mxu0 0
    %72 = vmatprep.subr.bf16.mxu0 0
    %73 = vmatpush1.bf16.msra.mxu0 0
    %74 = vmatprep.subr.bf16.mxu0 0
    %75 = vmatpush1.bf16.msra.mxu0 0
    %76 = vmatprep.subr.bf16.mxu0 0
    %77 = vmatpush1.bf16.msra.mxu0 0
    %78 = vmatprep.subr.bf16.mxu0 0
    %79 = vmatpush1.bf16.msra.mxu0 0
    %80 = vmatprep.subr.bf16.mxu0 0
    %81 = vmatpush1.bf16.msra.mxu0 0
    %82 = vmatprep.subr.bf16.mxu0 0
    %83 = vmatpush1.bf16.msra.mxu0 0
    %84 = vmatprep.mubr.bf16.mxu0 0
    %85 = vmatmul.mubr.bf16.gmra.mrb[0].mxu0 %v50
    %v86 = vpop.f32.mrb[0].mxu0
    %v87 = vadd.f32 %v34, %v86
    %v88 = vpop.f32.mrb[0].mxu0
    %v89 = vpop.f32.mrb[0].mxu0
    %v90 = vadd.f32 %v34, %v89
    %v91 = vpop.f32.mrb[0].mxu0
    %92 = vdwg.mxu0
    %v93 = vmax.f32 %v87, 0.0
    %v94 = vmax.f32 %v90, 0.0
    %v95 = vpack.c.bf16 %v94, %v93
    %v96 = vld [vmem:[%s3] sm:$0xf]
    %v97 = vld [vmem:[%s3 + $0x4] sm:$0xf]
    %v98 = vld [vmem:[%s3 + $0x8] sm:$0xf]
    %v99 = vld [vmem:[%s3 + $0xc] sm:$0xf]
    %v100 = vld [vmem:[%s4] sm:$0x1]
    %v102 = vlaneseq
    %v103 = vshrl.u32 %v102, 7
    %v104 = vsub.s32 0, %v103
    %v105 = vrot.slane %v100, %v104
    %v111 = vunpack.c.l.b16 %v96
    %v112 = vunpack.c.l.b16 %v97
    %v113 = vunpack.c.l.b16 %v98
    %v114 = vunpack.c.l.b16 %v99
    %v115 = vpack.c.b16 %v112, %v111
    %v116 = vpack.c.b16 %v114, %v113
    %v120 = vsel %vm48, %v95, 0
    %122 = vmatprep.subr.bf16.mxu0 0
    %123 = vmatpush1.bf16.msra.mxu0 %v115
    %124 = vmatprep.subr.bf16.mxu0 0
    %125 = vmatpush1.bf16.msra.mxu0 %v116
    %126 = vmatprep.subr.bf16.mxu0 0
    %127 = vmatpush1.bf16.msra.mxu0 0
    %128 = vmatprep.subr.bf16.mxu0 0
    %129 = vmatpush1.bf16.msra.mxu0 0
    %130 = vmatprep.subr.bf16.mxu0 0
    %131 = vmatpush1.bf16.msra.mxu0 0
    %132 = vmatprep.subr.bf16.mxu0 0
    %133 = vmatpush1.bf16.msra.mxu0 0
    %134 = vmatprep.subr.bf16.mxu0 0
    %135 = vmatpush1.bf16.msra.mxu0 0
    %136 = vmatprep.subr.bf16.mxu0 0
    %137 = vmatpush1.bf16.msra.mxu0 0
    %138 = vmatprep.subr.bf16.mxu0 0
    %139 = vmatpush1.bf16.msra.mxu0 0
    %140 = vmatprep.subr.bf16.mxu0 0
    %141 = vmatpush1.bf16.msra.mxu0 0
    %142 = vmatprep.subr.bf16.mxu0 0
    %143 = vmatpush1.bf16.msra.mxu0 0
    %144 = vmatprep.subr.bf16.mxu0 0
    %145 = vmatpush1.bf16.msra.mxu0 0
    %146 = vmatprep.subr.bf16.mxu0 0
    %147 = vmatpush1.bf16.msra.mxu0 0
    %148 = vmatprep.subr.bf16.mxu0 0
    %149 = vmatpush1.bf16.msra.mxu0 0
    %150 = vmatprep.subr.bf16.mxu0 0
    %151 = vmatpush1.bf16.msra.mxu0 0
    %152 = vmatprep.subr.bf16.mxu0 0
    %153 = vmatpush1.bf16.msra.mxu0 0
    %154 = vmatprep.mubr.bf16.mxu0 0
    %155 = vmatmul.mubr.bf16.gmra.mrb[0].mxu0 %v120
    %v156 = vpop.f32.mrb[0].mxu0
    %v157 = vadd.f32 %v105, %v156
    %v158 = vpop.f32.mrb[0].mxu0
    %v159 = vpop.f32.mrb[0].mxu0
    %v160 = vadd.f32 %v105, %v159
    %v161 = vpop.f32.mrb[0].mxu0
    %162 = vdwg.mxu0
    %vm163 = vcmask 130048
    %164 = vst.msk [vmem:[#allocation2] sm:$0xff] %vm163, %v157
    %165 = vst.msk [vmem:[#allocation2 + $0x8] sm:$0xff] %vm163, %v160
    // Predicated region
    $region22: #{tpu_custom_call.1} parent=1 // pred_check
      _
    $region23: #{tpu_custom_call.1} parent=1 // pred_check_branch
      %167 = sbr.rel (0) target = $region25
    $region24: #{tpu_custom_call.1} parent=1 // pred_region
      %s169 = ssub.s32 256, 32
      %170 = vsyncadd [#allocation3], %s169
      %s171 = sshll.u32 [#allocation2], 4
      %s172 = int_to_ptr.vmem [resolvable:$true] %s171
      %177 = dma.vmem_to_hbm [thread:$0]  %s172, 32, %s5, [#allocation3], 32, 32, 2
    $region25: #{tpu_custom_call.1} parent=1 // pred_fallthru
      _
    // Predicated region
    $region26: #{tpu_custom_call.1} parent=1 // pred_check
      _
    $region27: #{tpu_custom_call.1} parent=1 // pred_check_branch
      %179 = sbr.rel (0) target = $region29
    $region28: #{tpu_custom_call.1} parent=1 // pred_region
      %180 = dma.done [#allocation3], 256
    $region29: #{tpu_custom_call.1} parent=1 // pred_fallthru
      _
    %181 = vsyncpa [#allocation3], 1

</llo_original>
